<compile_context>
chip_gen: v7x
topology: tpu7x:2x2x1
jax: 0.10.0
libtpu: 0.0.40
codegen_flags: <defaults>
</compile_context>

<pallas_src>
import math
from typing import NamedTuple

import jax
import jax.numpy as jnp
from jax.experimental import pallas as pl
from jax.experimental.pallas import tpu as pltpu


def _round_up(n, m):
    return ((n + m - 1) // m) * m


# ---------------------------------------------------------------------------
# One-time hardware / API probes (import time; safe fallbacks).
# ---------------------------------------------------------------------------
def _probe_tpu():
    vmem_cap = 64 * 1024 * 1024      # conservative fallback = v7x per-TC VMEM
    n_tc = 1
    try:
        info = pltpu.get_tpu_info()
        vmem_cap = int(info.vmem_capacity_bytes)
        found = False
        for attr in ("num_tensorcores", "tensorcore_count", "num_cores", "cores_per_chip"):
            v = getattr(info, attr, None)
            if isinstance(v, int) and v > 0:
                n_tc = v
                found = True
                break
        if not found and "7" in str(getattr(info, "chip_version", "")):
            n_tc = 2                 # v7x: 2 TensorCores per chip
    except Exception:
        pass
    return vmem_cap, n_tc


_VMEM_CAPACITY_BYTES, _NUM_TENSORCORES = _probe_tpu()
_VMEM_BUDGET_BYTES = int(0.70 * _VMEM_CAPACITY_BYTES)   # per-step working-set budget
_VMEM_LIMIT_BYTES = int(0.85 * _VMEM_CAPACITY_BYTES)    # compiler scoped-VMEM limit


def _probe_weight_spec_kwargs():
    # Constant-index weight/bias blocks only need one pipeline buffer.
    if not hasattr(pl, "Buffered"):
        return {}
    try:
        pl.BlockSpec((8, 128), lambda i: (0, 0), pipeline_mode=pl.Buffered(1))
        return {"pipeline_mode": pl.Buffered(1)}
    except TypeError:
        return {}


_WEIGHT_SPEC_KWARGS = _probe_weight_spec_kwargs()


# ---------------------------------------------------------------------------
# Kernel
# ---------------------------------------------------------------------------
def ffn_kernel(x_ref, w1_ref, b1_ref, w2_ref, b2_ref, o_ref):
    # x_ref:  (tm, dim_pad)        row tile, input dtype (cast in-kernel)
    # w1_ref: (dim_pad, hid_pad)   resident, single-buffered, MXU operand dtype
    # b1_ref: (1, hid_pad)         f32
    # w2_ref: (hid_pad, dim_pad)   resident, single-buffered, MXU operand dtype
    # b2_ref: (1, dim_pad)         f32
    x = x_ref[...].astype(w1_ref.dtype)                 # free VPU cast (bf16 fast path)
    # First linear on the MXU, f32 accumulation; bias add in f32.
    h = jnp.dot(x, w1_ref[...], preferred_element_type=jnp.float32) + b1_ref[...]
    if w2_ref.dtype == jnp.float32:
        # Exact path: SiLU in f32 (sigmoid -> EUP, multiply -> VPU).
        a = h * jax.nn.sigmoid(h)
    else:
        # bf16 fast path (v5e/v6e/v7x MXU operands): SiLU in the operand dtype,
        # halving the largest intermediate; accumulation stays f32.
        hl = h.astype(w2_ref.dtype)
        a = hl * jax.nn.sigmoid(hl)
    o = jnp.dot(a.astype(w2_ref.dtype), w2_ref[...],
                preferred_element_type=jnp.float32) + b2_ref[...]
    o_ref[...] = o.astype(o_ref.dtype)


# ---------------------------------------------------------------------------
# One-time parameter preparation (hoisted out of the hot path)
# ---------------------------------------------------------------------------
class FFNParams(NamedTuple):
    w1: jax.Array    # (dim_pad, hid_pad), MXU operand dtype
    b1: jax.Array    # (1, hid_pad), f32
    w2: jax.Array    # (hid_pad, dim_pad), MXU operand dtype
    b2: jax.Array    # (1, dim_pad), f32
    dim: int
    hidden: int


def prepare_ffn_params(w1, b1, w2, b2, *, mxu_dtype=None):
    """Pad feature dims to lane-dense multiples of 128 and cast to the MXU operand dtype.
    w1: (dim, hidden); b1: (hidden,); w2: (hidden, dim); b2: (dim,)."""
    dim, hidden = w1.shape
    dim_pad = _round_up(dim, 128)
    hid_pad = _round_up(hidden, 128)
    md = w1.dtype if mxu_dtype is None else mxu_dtype
    w1p = jnp.pad(w1, ((0, dim_pad - dim), (0, hid_pad - hidden))).astype(md)
    w2p = jnp.pad(w2, ((0, hid_pad - hidden), (0, dim_pad - dim))).astype(md)
    b1p = jnp.pad(b1.astype(jnp.float32), (0, hid_pad - hidden)).reshape(1, hid_pad)
    b2p = jnp.pad(b2.astype(jnp.float32), (0, dim_pad - dim)).reshape(1, dim_pad)
    return FFNParams(w1p, b1p, w2p, b2p, int(dim), int(hidden))


# ---------------------------------------------------------------------------
# VMEM sizing + call wrapper
# ---------------------------------------------------------------------------
def _vmem_footprint(tm, dim_pad, hid_pad, x_isz, out_isz, w_isz):
    weights = (dim_pad * hid_pad + hid_pad * dim_pad) * w_isz \
              + (hid_pad + dim_pad) * 4                      # biases in f32
    io = 2 * tm * dim_pad * x_isz + 2 * tm * dim_pad * out_isz  # double-buffered x + out
    scratch = tm * hid_pad * 4 + tm * dim_pad * 4            # f32 h, f32 pre-store o
    if w_isz < 4:
        scratch += tm * hid_pad * w_isz                      # bf16 activated h
    return weights + io + scratch


def feed_forward_prepared(x, params: FFNParams, *, tm=1024, vmem_limit_bytes=None):
    """x: (batch, seq, dim), params from prepare_ffn_params (called once per model)."""
    if vmem_limit_bytes is None:
        vmem_limit_bytes = _VMEM_LIMIT_BYTES
    orig_dtype = x.dtype
    batch, seq, dim = x.shape
    assert dim == params.dim, "x feature dim does not match prepared params"
    dim_pad, hid_pad = params.w1.shape
    M = batch * seq

    x_isz = jnp.dtype(x.dtype).itemsize
    out_isz = jnp.dtype(orig_dtype).itemsize
    w_isz = jnp.dtype(params.w1.dtype).itemsize

    # --- pick the row tile: big (MXU-filling) but VMEM-budget-capped -------------
    tm_req = max(8, _round_up(int(tm), 8))
    while tm_req > 128 and _vmem_footprint(tm_req, dim_pad, hid_pad,
                                           x_isz, out_isz, w_isz) > _VMEM_BUDGET_BYTES:
        tm_req //= 2

    M8 = _round_up(M, 8)
    n_steps = max(1, math.ceil(M8 / tm_req))
    # Split across TensorCores only when the chip actually has >1 TC (v7x).
    if _NUM_TENSORCORES >= 2 and n_steps < _NUM_TENSORCORES and M8 >= 256 * _NUM_TENSORCORES:
        n_steps = _NUM_TENSORCORES
    tm_eff = _round_up(math.ceil(M8 / n_steps), 8)
    M_pad = n_steps * tm_eff

    x2d = x.reshape(M, dim)
    if M_pad != M or dim_pad != dim:
        x2d = jnp.pad(x2d, ((0, M_pad - M), (0, dim_pad - dim)))

    out2d = pl.pallas_call(
        ffn_kernel,
        out_shape=jax.ShapeDtypeStruct((M_pad, dim_pad), orig_dtype),
        grid_spec=pltpu.PrefetchScalarGridSpec(
            num_scalar_prefetch=0,
            grid=(n_steps,),
            in_specs=[
                pl.BlockSpec((tm_eff, dim_pad), lambda i: (i, 0)),                       # x rows
                pl.BlockSpec((dim_pad, hid_pad), lambda i: (0, 0), **_WEIGHT_SPEC_KWARGS),  # W1
                pl.BlockSpec((1, hid_pad), lambda i: (0, 0), **_WEIGHT_SPEC_KWARGS),        # b1
                pl.BlockSpec((hid_pad, dim_pad), lambda i: (0, 0), **_WEIGHT_SPEC_KWARGS),  # W2
                pl.BlockSpec((1, dim_pad), lambda i: (0, 0), **_WEIGHT_SPEC_KWARGS),        # b2
            ],
            out_specs=pl.BlockSpec((tm_eff, dim_pad), lambda i: (i, 0)),
        ),
        compiler_params=pltpu.CompilerParams(
            dimension_semantics=("parallel",),
            vmem_limit_bytes=vmem_limit_bytes,
        ),
    )(x2d, params.w1, params.b1, params.w2, params.b2)

    if M_pad == M and dim_pad == dim:
        return out2d.reshape(batch, seq, dim)     # no slice copy when unpadded
    return out2d[:M, :dim].reshape(batch, seq, dim)


def feed_forward(x, w1, b1, w2, b2, *, tm=1024, mxu_dtype=None):
    """Convenience wrapper (prep + call). For repeated use, call prepare_ffn_params once
    and feed_forward_prepared in the hot path."""
    return feed_forward_prepared(x, prepare_ffn_params(w1, b1, w2, b2, mxu_dtype=mxu_dtype),
                                 tm=tm)


# ---------------------------------------------------------------------------
# Reference + tests
# ---------------------------------------------------------------------------
def _init_params(key, dim, hidden_dim, dtype=jnp.float32):
    """nn.Linear-style init (uniform +/- 1/sqrt(fan_in)); stored (in, out) so the kernel
    computes x @ W directly."""
    k1, k2, k3, k4 = jax.random.split(key, 4)
    bound1 = 1.0 / (dim ** 0.5)
    bound2 = 1.0 / (hidden_dim ** 0.5)
    w1 = jax.random.uniform(k1, (dim, hidden_dim), dtype, -bound1, bound1)
    b1 = jax.random.uniform(k2, (hidden_dim,), dtype, -bound1, bound1)
    w2 = jax.random.uniform(k3, (hidden_dim, dim), dtype, -bound2, bound2)
    b2 = jax.random.uniform(k4, (dim,), dtype, -bound2, bound2)
    return w1, b1, w2, b2


def _ref_ffn(x, w1, b1, w2, b2):
    h = x @ w1 + b1
    h = h * jax.nn.sigmoid(h)
    return h @ w2 + b2


if __name__ == "__main__":
    key = jax.random.PRNGKey(0)
    kx, kp, kx2, kp2 = jax.random.split(key, 4)

    # --- Test A: tiny MobileViT-like FFN, f32 (exact-ish path) ---------------------
    batch, seq, dim, hidden_dim = 2, 8, 32, 64
    x = jax.random.normal(kx, (batch, seq, dim), dtype=jnp.float32)
    w1, b1, w2, b2 = _init_params(kp, dim, hidden_dim)
    params_f32 = prepare_ffn_params(w1, b1, w2, b2)

    out = jax.block_until_ready(feed_forward_prepared(x, params_f32))
    ref = _ref_ffn(x, w1, b1, w2, b2)
    assert out.shape == (batch, seq, dim)
    assert jnp.allclose(out, ref, atol=1e-4, rtol=1e-4)

    # --- Test A (bf16 MXU operands + bf16 SiLU: v5e/v6e/v7x fast path) -------------
    params_bf16 = prepare_ffn_params(w1, b1, w2, b2, mxu_dtype=jnp.bfloat16)
    out_bf16 = jax.block_until_ready(feed_forward_prepared(x, params_bf16))
    assert out_bf16.dtype == x.dtype
    assert jnp.allclose(out_bf16, ref, atol=5e-2, rtol=5e-2)

    # --- Test B: M not a multiple of the tile -> exercises row padding + multi-step grid
    batch2, seq2, dim2, hidden2 = 4, 275, 48, 96
    x2 = jax.random.normal(kx2, (batch2, seq2, dim2), dtype=jnp.float32)
    p2 = _init_params(kp2, dim2, hidden2)
    out2 = jax.block_until_ready(feed_forward(x2, *p2))
    ref2 = _ref_ffn(x2, *p2)
    assert out2.shape == (batch2, seq2, dim2)
    assert jnp.allclose(out2, ref2, atol=1e-4, rtol=1e-4)

    print("KERNEL_OK")
</pallas_src>

<mosaic_0001>
module attributes {stable_mosaic.version = 11 : i64} {
  func.func @ffn_kernel(%arg0: i32, %arg1: memref<16x128xf32, #tpu.memory_space<vmem>>, %arg2: memref<128x128xf32, #tpu.memory_space<vmem>>, %arg3: memref<1x128xf32, #tpu.memory_space<vmem>>, %arg4: memref<128x128xf32, #tpu.memory_space<vmem>>, %arg5: memref<1x128xf32, #tpu.memory_space<vmem>>, %arg6: memref<16x128xf32, #tpu.memory_space<vmem>>) attributes {dimension_semantics = [#tpu.dimension_semantics<parallel>], iteration_bounds = array<i64: 1>, scalar_prefetch = 0 : i64, scratch_operands = 0 : i64, tpu.core_type = #tpu.core_type<tc>, window_params = [{transform_indices = @transform_0, window_bounds = array<i64: 16, 128>}, {pipeline_mode = #tpu.pipeline_mode<synchronous>, transform_indices = @transform_1, window_bounds = array<i64: 128, 128>}, {pipeline_mode = #tpu.pipeline_mode<synchronous>, transform_indices = @transform_2, window_bounds = array<i64: 1, 128>}, {pipeline_mode = #tpu.pipeline_mode<synchronous>, transform_indices = @transform_3, window_bounds = array<i64: 128, 128>}, {pipeline_mode = #tpu.pipeline_mode<synchronous>, transform_indices = @transform_4, window_bounds = array<i64: 1, 128>}, {transform_indices = @transform_5, window_bounds = array<i64: 16, 128>}]} {
    %c0 = arith.constant 0 : index
    %c0_0 = arith.constant 0 : index
    %0 = vector.load %arg1[%c0, %c0_0] : memref<16x128xf32, #tpu.memory_space<vmem>>, vector<16x128xf32>
    %c0_1 = arith.constant 0 : index
    %c0_2 = arith.constant 0 : index
    %1 = vector.load %arg2[%c0_1, %c0_2] : memref<128x128xf32, #tpu.memory_space<vmem>>, vector<128x128xf32>
    %cst = arith.constant dense<0.000000e+00> : vector<16x128xf32>
    %2 = tpu.matmul %0, %1, %cst {dimension_numbers = #tpu.dot_dimension_numbers<[1], [0], [0], [1], [0, 0, 1, 1], [], []>} : vector<16x128xf32>, vector<128x128xf32>, vector<16x128xf32> -> vector<16x128xf32>
    %c0_3 = arith.constant 0 : index
    %c0_4 = arith.constant 0 : index
    %3 = vector.load %arg3[%c0_3, %c0_4] : memref<1x128xf32, #tpu.memory_space<vmem>>, vector<1x128xf32>
    %4 = vector.broadcast %3 : vector<1x128xf32> to vector<16x128xf32>
    %5 = arith.addf %2, %4 : vector<16x128xf32>
    %6 = arith.negf %5 : vector<16x128xf32>
    %7 = math.exp %6 : vector<16x128xf32>
    %cst_5 = arith.constant 1.000000e+00 : f32
    %8 = vector.broadcast %cst_5 : f32 to vector<16x128xf32>
    %9 = arith.addf %8, %7 : vector<16x128xf32>
    %10 = arith.divf %8, %9 : vector<16x128xf32>
    %11 = arith.mulf %5, %10 : vector<16x128xf32>
    %c0_6 = arith.constant 0 : index
    %c0_7 = arith.constant 0 : index
    %12 = vector.load %arg4[%c0_6, %c0_7] : memref<128x128xf32, #tpu.memory_space<vmem>>, vector<128x128xf32>
    %cst_8 = arith.constant dense<0.000000e+00> : vector<16x128xf32>
    %13 = tpu.matmul %11, %12, %cst_8 {dimension_numbers = #tpu.dot_dimension_numbers<[1], [0], [0], [1], [0, 0, 1, 1], [], []>} : vector<16x128xf32>, vector<128x128xf32>, vector<16x128xf32> -> vector<16x128xf32>
    %c0_9 = arith.constant 0 : index
    %c0_10 = arith.constant 0 : index
    %14 = vector.load %arg5[%c0_9, %c0_10] : memref<1x128xf32, #tpu.memory_space<vmem>>, vector<1x128xf32>
    %15 = vector.broadcast %14 : vector<1x128xf32> to vector<16x128xf32>
    %16 = arith.addf %13, %15 : vector<16x128xf32>
    %c0_11 = arith.constant 0 : index
    %c0_12 = arith.constant 0 : index
    %17 = vector.load %arg6[%c0_11, %c0_12] : memref<16x128xf32, #tpu.memory_space<vmem>>, vector<16x128xf32>
    tpu.vector_store %arg6[%c0_11, %c0_12], %16 {strides = array<i32>} : memref<16x128xf32, #tpu.memory_space<vmem>>, vector<16x128xf32>,
    return
  }
  func.func @transform_0(%arg0: i32) -> (i32, i32) {
    %c0_i32 = arith.constant 0 : i32
    %c0_i32_0 = arith.constant 0 : i32
    return %arg0, %c0_i32 : i32, i32
  }
  func.func @transform_1(%arg0: i32) -> (i32, i32) {
    %c0_i32 = arith.constant 0 : i32
    %c0_i32_0 = arith.constant 0 : i32
    %c0_i32_1 = arith.constant 0 : i32
    return %c0_i32, %c0_i32_0 : i32, i32
  }
  func.func @transform_2(%arg0: i32) -> (i32, i32) {
    %c0_i32 = arith.constant 0 : i32
    %c0_i32_0 = arith.constant 0 : i32
    %c0_i32_1 = arith.constant 0 : i32
    return %c0_i32, %c0_i32_0 : i32, i32
  }
  func.func @transform_3(%arg0: i32) -> (i32, i32) {
    %c0_i32 = arith.constant 0 : i32
    %c0_i32_0 = arith.constant 0 : i32
    %c0_i32_1 = arith.constant 0 : i32
    return %c0_i32, %c0_i32_0 : i32, i32
  }
  func.func @transform_4(%arg0: i32) -> (i32, i32) {
    %c0_i32 = arith.constant 0 : i32
    %c0_i32_0 = arith.constant 0 : i32
    %c0_i32_1 = arith.constant 0 : i32
    return %c0_i32, %c0_i32_0 : i32, i32
  }
  func.func @transform_5(%arg0: i32) -> (i32, i32) {
    %c0_i32 = arith.constant 0 : i32
    %c0_i32_0 = arith.constant 0 : i32
    return %arg0, %c0_i32 : i32, i32
  }
}

</mosaic_0001>

<llo_original>
// kernel: tpu_custom_call.1
$region0: #{tpu_custom_call.1}
  #allocation0 [shape = 'u32[]', space=smem, size = 0x4, offset = 0x4, fixed_abs, tag = 'smem constant byte address 0x4 - core index']
  #allocation1 [shape = 'u32[144,128]{1,0:T(1,128)}', space=vmem, size = 0x12000, scoped, tag = 'internal scratch']
  %s0 = inlined_call_operand.hbm [shape: f32[16,128], index: 0, kind: input, shape index: {}]
  %s1 = inlined_call_operand.hbm [shape: f32[128,128], index: 1, kind: input, shape index: {}]
  %s2 = inlined_call_operand.vmem [shape: f32[1,128], index: 2, kind: input, shape index: {}]
  %s3 = inlined_call_operand.hbm [shape: f32[128,128], index: 3, kind: input, shape index: {}]
  %s4 = inlined_call_operand.vmem [shape: f32[1,128], index: 4, kind: input, shape index: {}]
  %s5 = inlined_call_operand.hbm [shape: f32[16,128], index: 5, kind: output, shape index: {}]
  %s6 = sld [smem:[#allocation0]]
  $region42: #{tpu_custom_call.1} parent=0
    _
  %s8 = ssub.s32 1, %s6
  %s9 = scalar_select 0, %s8, %s6
  $region1: #{tpu_custom_call.1} parent=0
    #allocation2 [shape = 'u8[8192]{0}', space=vmem, size = 0x2000, scoped, tag = 'input window, operand 0, single buffered']
    #allocation3 [shape = 's32[1]{0}', space=sflag, size = 0x4, scoped, tag = 'scoped memory for tpu_custom_call.1']
    #allocation4 [shape = 's32[1]{0}', space=sflag, size = 0x4, scoped, tag = 'scoped memory for tpu_custom_call.1']
    #allocation5 [shape = 'u8[65536]{0}', space=vmem, size = 0x10000, scoped, tag = 'input window, operand 1, single buffered']
    #allocation6 [shape = 's32[1]{0}', space=sflag, size = 0x4, scoped, tag = 'scoped memory for tpu_custom_call.1']
    #allocation7 [shape = 'u8[65536]{0}', space=vmem, size = 0x10000, scoped, tag = 'input window, operand 3, single buffered']
    #allocation8 [shape = 'u8[8192]{0}', space=vmem, size = 0x2000, scoped, tag = 'output window, operand 0, single buffered']
    %10 = vsyncpa [#allocation3], 0
    %11 = vsyncpa [#allocation6], 0
    %12 = vsyncpa [#allocation4], 0
    // Predicated region
    $region2: #{tpu_custom_call.1} parent=1 // pred_check
      _
    $region3: #{tpu_custom_call.1} parent=1 // pred_check_branch
      %14 = sbr.rel (0) target = $region5
    $region4: #{tpu_custom_call.1} parent=1 // pred_region
      %s16 = ssub.s32 256, 256
      %17 = vsyncadd [#allocation3], %s16
      %s18 = sshll.u32 [#allocation2], 4
      %s19 = int_to_ptr.vmem [resolvable:$true] %s18
      %24 = dma.hbm_to_vmem [thread:$0]  %s0, 256, %s19, [#allocation3], 128, 128, 8
    $region5: #{tpu_custom_call.1} parent=1 // pred_fallthru
      _
    // Predicated region
    $region6: #{tpu_custom_call.1} parent=1 // pred_check
      _
    $region7: #{tpu_custom_call.1} parent=1 // pred_check_branch
      %26 = sbr.rel (0) target = $region9
    $region8: #{tpu_custom_call.1} parent=1 // pred_region
      %s28 = ssub.s32 2048, 2048
      %29 = vsyncadd [#allocation6], %s28
      %s30 = sshll.u32 [#allocation5], 4
      %s31 = int_to_ptr.vmem [resolvable:$true] %s30
      %36 = dma.hbm_to_vmem [thread:$0]  %s1, 2048, %s31, [#allocation6], 128, 128, 8
    $region9: #{tpu_custom_call.1} parent=1 // pred_fallthru
      _
    // Predicated region
    $region10: #{tpu_custom_call.1} parent=1 // pred_check
      _
    $region11: #{tpu_custom_call.1} parent=1 // pred_check_branch
      %38 = sbr.rel (0) target = $region13
    $region12: #{tpu_custom_call.1} parent=1 // pred_region
      _
    $region13: #{tpu_custom_call.1} parent=1 // pred_fallthru
      _
    // Predicated region
    $region14: #{tpu_custom_call.1} parent=1 // pred_check
      _
    $region15: #{tpu_custom_call.1} parent=1 // pred_check_branch
      %40 = sbr.rel (0) target = $region17
    $region16: #{tpu_custom_call.1} parent=1 // pred_region
      %s42 = ssub.s32 2048, 2048
      %43 = vsyncadd [#allocation6], %s42
      %s44 = sshll.u32 [#allocation7], 4
      %s45 = int_to_ptr.vmem [resolvable:$true] %s44
      %50 = dma.hbm_to_vmem [thread:$0]  %s3, 2048, %s45, [#allocation6], 128, 128, 8
    $region17: #{tpu_custom_call.1} parent=1 // pred_fallthru
      _
    // Predicated region
    $region18: #{tpu_custom_call.1} parent=1 // pred_check
      _
    $region19: #{tpu_custom_call.1} parent=1 // pred_check_branch
      %52 = sbr.rel (0) target = $region21
    $region20: #{tpu_custom_call.1} parent=1 // pred_region
      _
    $region21: #{tpu_custom_call.1} parent=1 // pred_fallthru
      _
    // Predicated region
    $region22: #{tpu_custom_call.1} parent=1 // pred_check
      _
    $region23: #{tpu_custom_call.1} parent=1 // pred_check_branch
      %54 = sbr.rel (0) target = $region25
    $region24: #{tpu_custom_call.1} parent=1 // pred_region
      %55 = dma.done [#allocation3], 256
    $region25: #{tpu_custom_call.1} parent=1 // pred_fallthru
      _
    // Predicated region
    $region26: #{tpu_custom_call.1} parent=1 // pred_check
      _
    $region27: #{tpu_custom_call.1} parent=1 // pred_check_branch
      %57 = sbr.rel (0) target = $region29
    $region28: #{tpu_custom_call.1} parent=1 // pred_region
      %58 = dma.done [#allocation6], 2048
    $region29: #{tpu_custom_call.1} parent=1 // pred_fallthru
      _
    // Predicated region
    $region30: #{tpu_custom_call.1} parent=1 // pred_check
      _
    $region31: #{tpu_custom_call.1} parent=1 // pred_check_branch
      %60 = sbr.rel (0) target = $region33
    $region32: #{tpu_custom_call.1} parent=1 // pred_region
      %61 = dma.done [#allocation6], 2048
    $region33: #{tpu_custom_call.1} parent=1 // pred_fallthru
      _
    %v62 = vld [vmem:[#allocation2] sm:$0xff]
    %v63 = vld [vmem:[#allocation2 + $0x8] sm:$0xff]
    %v64 = vld [vmem:[#allocation5] sm:$0xff]
    %v65 = vld [vmem:[#allocation5 + $0x8] sm:$0xff]
    %v66 = vld [vmem:[#allocation5 + $0x10] sm:$0xff]
    %v67 = vld [vmem:[#allocation5 + $0x18] sm:$0xff]
    %v68 = vld [vmem:[#allocation5 + $0x20] sm:$0xff]
    %v69 = vld [vmem:[#allocation5 + $0x28] sm:$0xff]
    %v70 = vld [vmem:[#allocation5 + $0x30] sm:$0xff]
    %v71 = vld [vmem:[#allocation5 + $0x38] sm:$0xff]
    %v72 = vld [vmem:[#allocation5 + $0x40] sm:$0xff]
    %v73 = vld [vmem:[#allocation5 + $0x48] sm:$0xff]
    %v74 = vld [vmem:[#allocation5 + $0x50] sm:$0xff]
    %v75 = vld [vmem:[#allocation5 + $0x58] sm:$0xff]
    %v76 = vld [vmem:[#allocation5 + $0x60] sm:$0xff]
    %v77 = vld [vmem:[#allocation5 + $0x68] sm:$0xff]
    %v78 = vld [vmem:[#allocation5 + $0x70] sm:$0xff]
    %v79 = vld [vmem:[#allocation5 + $0x78] sm:$0xff]
    %v80 = vld [vmem:[%s2] sm:$0x1]
    %v82 = vlaneseq
    %v83 = vshrl.u32 %v82, 7
    %v84 = vsub.s32 0, %v83
    %v85 = vrot.slane %v80, %v84
    %87 = vmatprep.subr.mxu0 0.0
    %88 = vmatpush1.msra.mxu0 %v64
    %89 = vmatprep.subr.mxu0 0.0
    %90 = vmatpush1.msra.mxu0 %v65
    %91 = vmatprep.subr.mxu0 0.0
    %92 = vmatpush1.msra.mxu0 %v66
    %93 = vmatprep.subr.mxu0 0.0
    %94 = vmatpush1.msra.mxu0 %v67
    %95 = vmatprep.subr.mxu0 0.0
    %96 = vmatpush1.msra.mxu0 %v68
    %97 = vmatprep.subr.mxu0 0.0
    %98 = vmatpush1.msra.mxu0 %v69
    %99 = vmatprep.subr.mxu0 0.0
    %100 = vmatpush1.msra.mxu0 %v70
    %101 = vmatprep.subr.mxu0 0.0
    %102 = vmatpush1.msra.mxu0 %v71
    %103 = vmatprep.subr.mxu0 0.0
    %104 = vmatpush1.msra.mxu0 %v72
    %105 = vmatprep.subr.mxu0 0.0
    %106 = vmatpush1.msra.mxu0 %v73
    %107 = vmatprep.subr.mxu0 0.0
    %108 = vmatpush1.msra.mxu0 %v74
    %109 = vmatprep.subr.mxu0 0.0
    %110 = vmatpush1.msra.mxu0 %v75
    %111 = vmatprep.subr.mxu0 0.0
    %112 = vmatpush1.msra.mxu0 %v76
    %113 = vmatprep.subr.mxu0 0.0
    %114 = vmatpush1.msra.mxu0 %v77
    %115 = vmatprep.subr.mxu0 0.0
    %116 = vmatpush1.msra.mxu0 %v78
    %117 = vmatprep.subr.mxu0 0.0
    %118 = vmatpush1.msra.mxu0 %v79
    %119 = vmatprep.subr.mxu0 0.0
    %120 = vmatpush1.msra.mxu0 0.0
    %121 = vmatprep.subr.mxu0 0.0
    %122 = vmatpush1.msra.mxu0 0.0
    %123 = vmatprep.subr.mxu0 0.0
    %124 = vmatpush1.msra.mxu0 0.0
    %125 = vmatprep.subr.mxu0 0.0
    %126 = vmatpush1.msra.mxu0 0.0
    %127 = vmatprep.subr.mxu0 0.0
    %128 = vmatpush1.msra.mxu0 0.0
    %129 = vmatprep.subr.mxu0 0.0
    %130 = vmatpush1.msra.mxu0 0.0
    %131 = vmatprep.subr.mxu0 0.0
    %132 = vmatpush1.msra.mxu0 0.0
    %133 = vmatprep.subr.mxu0 0.0
    %134 = vmatpush1.msra.mxu0 0.0
    %135 = vmatprep.subr.mxu0 0.0
    %136 = vmatpush1.msra.mxu0 0.0
    %137 = vmatprep.subr.mxu0 0.0
    %138 = vmatpush1.msra.mxu0 0.0
    %139 = vmatprep.subr.mxu0 0.0
    %140 = vmatpush1.msra.mxu0 0.0
    %141 = vmatprep.subr.mxu0 0.0
    %142 = vmatpush1.msra.mxu0 0.0
    %143 = vmatprep.subr.mxu0 0.0
    %144 = vmatpush1.msra.mxu0 0.0
    %145 = vmatprep.subr.mxu0 0.0
    %146 = vmatpush1.msra.mxu0 0.0
    %147 = vmatprep.subr.mxu0 0.0
    %148 = vmatpush1.msra.mxu0 0.0
    %149 = vmatprep.subr.mxu0 0.0
    %150 = vmatpush1.msra.mxu0 0.0
    %151 = vmatprep.mubr.f32.mxu0 0.0
    %152 = vmatmul.mubr.f32.gmra.mrb[0].mxu0 %v62
    %v153 = vpop.f32.mrb[0].mxu0
    %v154 = vadd.f32 %v85, %v153
    %v155 = vpop.f32.mrb[0].mxu0
    %156 = vmatprep.mubr.f32.mxu0 0.0
    %157 = vmatmul.mubr.f32.gmra.mrb[0].mxu0 %v63
    %v158 = vpop.f32.mrb[0].mxu0
    %v159 = vadd.f32 %v85, %v158
    %v160 = vpop.f32.mrb[0].mxu0
    %161 = vdwg.mxu0
    %v162 = vxor.u32 %v154, 2147483648
    %v163 = vxor.u32 %v159, 2147483648
    %v164 = vmul.f32 %v162, 1.442695
    %v165 = vpow.pop %v164
    %v166 = vmul.f32 %v163, 1.442695
    %v167 = vpow.pop %v166
    %v168 = vadd.f32 %v165, 1.0
    %v169 = vadd.f32 %v167, 1.0
    %v170 = vrcp.pop %v168
    %v171 = vmul.f32 1.0, %v170
    %v172 = vrcp.pop %v169
    %v173 = vmul.f32 1.0, %v172
    %v174 = vmul.f32 %v154, %v171
    %v175 = vmul.f32 %v159, %v173
    %v176 = vld [vmem:[#allocation7] sm:$0xff]
    %v177 = vld [vmem:[#allocation7 + $0x8] sm:$0xff]
    %v178 = vld [vmem:[#allocation7 + $0x10] sm:$0xff]
    %v179 = vld [vmem:[#allocation7 + $0x18] sm:$0xff]
    %v180 = vld [vmem:[#allocation7 + $0x20] sm:$0xff]
    %v181 = vld [vmem:[#allocation7 + $0x28] sm:$0xff]
    %v182 = vld [vmem:[#allocation7 + $0x30] sm:$0xff]
    %v183 = vld [vmem:[#allocation7 + $0x38] sm:$0xff]
    %v184 = vld [vmem:[#allocation7 + $0x40] sm:$0xff]
    %v185 = vld [vmem:[#allocation7 + $0x48] sm:$0xff]
    %v186 = vld [vmem:[#allocation7 + $0x50] sm:$0xff]
    %v187 = vld [vmem:[#allocation7 + $0x58] sm:$0xff]
    %v188 = vld [vmem:[#allocation7 + $0x60] sm:$0xff]
    %v189 = vld [vmem:[#allocation7 + $0x68] sm:$0xff]
    %v190 = vld [vmem:[#allocation7 + $0x70] sm:$0xff]
    %v191 = vld [vmem:[#allocation7 + $0x78] sm:$0xff]
    %v192 = vld [vmem:[%s4] sm:$0x1]
    %v194 = vlaneseq
    %v195 = vshrl.u32 %v194, 7
    %v196 = vsub.s32 0, %v195
    %v197 = vrot.slane %v192, %v196
    %199 = vmatprep.subr.mxu0 0.0
    %200 = vmatpush1.msra.mxu0 %v176
    %201 = vmatprep.subr.mxu0 0.0
    %202 = vmatpush1.msra.mxu0 %v177
    %203 = vmatprep.subr.mxu0 0.0
    %204 = vmatpush1.msra.mxu0 %v178
    %205 = vmatprep.subr.mxu0 0.0
    %206 = vmatpush1.msra.mxu0 %v179
    %207 = vmatprep.subr.mxu0 0.0
    %208 = vmatpush1.msra.mxu0 %v180
    %209 = vmatprep.subr.mxu0 0.0
    %210 = vmatpush1.msra.mxu0 %v181
    %211 = vmatprep.subr.mxu0 0.0
    %212 = vmatpush1.msra.mxu0 %v182
    %213 = vmatprep.subr.mxu0 0.0
    %214 = vmatpush1.msra.mxu0 %v183
    %215 = vmatprep.subr.mxu0 0.0
    %216 = vmatpush1.msra.mxu0 %v184
    %217 = vmatprep.subr.mxu0 0.0
    %218 = vmatpush1.msra.mxu0 %v185
    %219 = vmatprep.subr.mxu0 0.0
    %220 = vmatpush1.msra.mxu0 %v186
    %221 = vmatprep.subr.mxu0 0.0
    %222 = vmatpush1.msra.mxu0 %v187
    %223 = vmatprep.subr.mxu0 0.0
    %224 = vmatpush1.msra.mxu0 %v188
    %225 = vmatprep.subr.mxu0 0.0
    %226 = vmatpush1.msra.mxu0 %v189
    %227 = vmatprep.subr.mxu0 0.0
    %228 = vmatpush1.msra.mxu0 %v190
    %229 = vmatprep.subr.mxu0 0.0
    %230 = vmatpush1.msra.mxu0 %v191
    %231 = vmatprep.subr.mxu0 0.0
    %232 = vmatpush1.msra.mxu0 0.0
    %233 = vmatprep.subr.mxu0 0.0
    %234 = vmatpush1.msra.mxu0 0.0
    %235 = vmatprep.subr.mxu0 0.0
    %236 = vmatpush1.msra.mxu0 0.0
    %237 = vmatprep.subr.mxu0 0.0
    %238 = vmatpush1.msra.mxu0 0.0
    %239 = vmatprep.subr.mxu0 0.0
    %240 = vmatpush1.msra.mxu0 0.0
    %241 = vmatprep.subr.mxu0 0.0
    %242 = vmatpush1.msra.mxu0 0.0
    %243 = vmatprep.subr.mxu0 0.0
    %244 = vmatpush1.msra.mxu0 0.0
    %245 = vmatprep.subr.mxu0 0.0
    %246 = vmatpush1.msra.mxu0 0.0
    %247 = vmatprep.subr.mxu0 0.0
    %248 = vmatpush1.msra.mxu0 0.0
    %249 = vmatprep.subr.mxu0 0.0
    %250 = vmatpush1.msra.mxu0 0.0
    %251 = vmatprep.subr.mxu0 0.0
    %252 = vmatpush1.msra.mxu0 0.0
    %253 = vmatprep.subr.mxu0 0.0
    %254 = vmatpush1.msra.mxu0 0.0
    %255 = vmatprep.subr.mxu0 0.0
    %256 = vmatpush1.msra.mxu0 0.0
    %257 = vmatprep.subr.mxu0 0.0
    %258 = vmatpush1.msra.mxu0 0.0
    %259 = vmatprep.subr.mxu0 0.0
    %260 = vmatpush1.msra.mxu0 0.0
    %261 = vmatprep.subr.mxu0 0.0
    %262 = vmatpush1.msra.mxu0 0.0
    %263 = vmatprep.mubr.f32.mxu0 0.0
    %264 = vmatmul.mubr.f32.gmra.mrb[0].mxu0 %v174
    %v265 = vpop.f32.mrb[0].mxu0
    %v266 = vadd.f32 %v197, %v265
    %v267 = vpop.f32.mrb[0].mxu0
    %268 = vmatprep.mubr.f32.mxu0 0.0
    %269 = vmatmul.mubr.f32.gmra.mrb[0].mxu0 %v175
    %v270 = vpop.f32.mrb[0].mxu0
    %v271 = vadd.f32 %v197, %v270
    %v272 = vpop.f32.mrb[0].mxu0
    %273 = vdwg.mxu0
    %274 = vst [vmem:[#allocation8] sm:$0xff] %v266
    %275 = vst [vmem:[#allocation8 + $0x8] sm:$0xff] %v271
    // Predicated region
    $region34: #{tpu_custom_call.1} parent=1 // pred_check
      _
    $region35: #{tpu_custom_call.1} parent=1 // pred_check_branch
      %277 = sbr.rel (0) target = $region37
    $region36: #{tpu_custom_call.1} parent=1 // pred_region
      %s279 = ssub.s32 256, 256
      %280 = vsyncadd [#allocation4], %s279
      %s281 = sshll.u32 [#allocation8], 4
      %s282 = int_to_ptr.vmem [resolvable:$true] %s281
      %287 = dma.vmem_to_hbm [thread:$0]  %s282, 256, %s5, [#allocation4], 128, 128, 8
    $region37: #{tpu_custom_call.1} parent=1 // pred_fallthru
      _
    // Predicated region
    $region38: #{tpu_custom_call.1} parent=1 // pred_check
      _
    $region39: #{tpu_custom_call.1} parent=1 // pred_check_branch
      %289 = sbr.rel (0) target = $region41
    $region40: #{tpu_custom_call.1} parent=1 // pred_region
      %290 = dma.done [#allocation4], 256
    $region41: #{tpu_custom_call.1} parent=1 // pred_fallthru
      _
    %291 = vsyncpa [#allocation3], 1
    %292 = vsyncpa [#allocation6], 1
    %293 = vsyncpa [#allocation4], 1

</llo_original>
